<compile_context>
chip_gen: v6e
topology: v6e:2x2x1
jax: 0.10.0
libtpu: 0.0.40
codegen_flags: <defaults>
</compile_context>

<pallas_src>
import jax
import jax.numpy as jnp
from jax import lax
from jax.experimental import pallas as pl
from jax.experimental.pallas import tpu as pltpu


def _round_up(x, m):
    return ((x + m - 1) // m) * m


# ---------------------------------------------------------------------------
# Pallas kernel: fused embedding select + unrolled tanh recurrence + final FC
# ---------------------------------------------------------------------------
def rnn_fc_kernel(ids_ref, p_ref, whh_ref, wfc_ref, bfc_ref, out_ref, xp_ref):
    # ids_ref : SMEM (B, T) int32   raw batch-first token ids (scalar prefetch)
    # p_ref   : VMEM (V_pad, H) f32 pre-projected table P = emb @ W_ih + b_ih + b_hh
    # whh_ref : VMEM (H, H) bf16    hidden->hidden weights (transposed vs PyTorch)
    # wfc_ref : VMEM (H, C_pad) bf16
    # bfc_ref : VMEM (1, C_pad) f32
    # out_ref : VMEM (B, C_pad) f32 lane-dense logits block
    # xp_ref  : VMEM scratch (B*T, H) f32, per-(t,b) input term, time-major rows
    B, T = ids_ref.shape
    Vp, H = p_ref.shape

    # --- Prologue: fused embedding lookup + input projection ---------------
    # P already contains emb @ W_ih + (b_ih + b_hh), so the per-token input
    # term is a pure row-select of P.  Select via one_hot(ids) @ P on the MXU;
    # the one-hot rows are built straight from the SMEM scalars (no gather,
    # no id transpose) and emitted in time-major order (row = t*B + b) so the
    # recurrence reads contiguous (B, H) slabs.  Out-of-vocab ids (error case)
    # would select an all-zero row.
    iota_v = lax.broadcasted_iota(jnp.int32, (1, Vp), 1)
    rows = []
    for t in range(T):
        for b in range(B):
            rows.append((iota_v == ids_ref[b, t]).astype(jnp.float32))
    onehot = jnp.concatenate(rows, axis=0)                       # (B*T, Vp)
    xp_ref[...] = jnp.dot(onehot, p_ref[...],
                          preferred_element_type=jnp.float32)    # (B*T, H)

    # --- Serial recurrence, fully unrolled (T small & static) --------------
    # bf16 operands keep the MXU single-pass; accumulation stays f32.
    whh = whh_ref[...]                                           # vreg-resident
    h = jnp.zeros((B, H), jnp.float32)
    for t in range(T):
        x_t = xp_ref[pl.ds(t * B, B), :]                         # static slice
        h = jnp.tanh(x_t + jnp.dot(h.astype(jnp.bfloat16), whh,
                                   preferred_element_type=jnp.float32))

    # --- Final FC on the last hidden state ----------------------------------
    out_ref[...] = (jnp.dot(h.astype(jnp.bfloat16), wfc_ref[...],
                            preferred_element_type=jnp.float32)
                    + bfc_ref[...]).astype(out_ref.dtype)


# ---------------------------------------------------------------------------
# One-time parameter preparation (hoisted out of the per-call forward)
# ---------------------------------------------------------------------------
def prepare_params(params):
    emb, w_ih, w_hh = params["embedding"], params["w_ih"], params["w_hh"]
    b_ih, b_hh = params["b_ih"], params["b_hh"]
    w_fc, b_fc = params["w_fc"], params["b_fc"]
    V = emb.shape[0]
    C = w_fc.shape[1]
    V_pad = _round_up(V, 128)      # lane-dense one-hot contraction dim
    C_pad = _round_up(C, 128)      # lane-dense output / FC columns

    # Fold the input projection and both recurrent biases into the embedding
    # table (V*H is tiny): P[v] = emb[v] @ W_ih + b_ih + b_hh.
    p = emb @ w_ih + b_ih + b_hh                                  # (V, H) f32
    p = jnp.pad(p, ((0, V_pad - V), (0, 0))).astype(jnp.float32)  # (V_pad, H)

    return {
        "p": p,                                                       # f32
        "w_hh": w_hh.astype(jnp.bfloat16),                            # (H, H)
        "w_fc": jnp.pad(w_fc, ((0, 0), (0, C_pad - C))).astype(jnp.bfloat16),
        "b_fc": jnp.pad(b_fc, ((0, 0), (0, C_pad - C))).astype(jnp.float32),
    }


# ---------------------------------------------------------------------------
# Forward pass (per-call wrapper: just the pallas_call + final slice)
# ---------------------------------------------------------------------------
def rnn_model_forward(token_ids, prepared, num_classes):
    """token_ids: (B, T) int32  ->  logits (B, num_classes) float32."""
    p, w_hh = prepared["p"], prepared["w_hh"]
    w_fc, b_fc = prepared["w_fc"], prepared["b_fc"]
    B, T = token_ids.shape
    V_pad, H = p.shape
    C_pad = w_fc.shape[1]

    grid_spec = pltpu.PrefetchScalarGridSpec(
        num_scalar_prefetch=1,        # token ids -> SMEM, read as scalars
        grid=(1,),                    # whole recurrence in one kernel step
        in_specs=[
            pl.BlockSpec((V_pad, H), lambda i, ids: (0, 0)),      # P
            pl.BlockSpec((H, H), lambda i, ids: (0, 0)),          # W_hh (bf16)
            pl.BlockSpec((H, C_pad), lambda i, ids: (0, 0)),      # W_fc (bf16)
            pl.BlockSpec((1, C_pad), lambda i, ids: (0, 0)),      # b_fc
        ],
        out_specs=pl.BlockSpec((B, C_pad), lambda i, ids: (0, 0)),
        scratch_shapes=[pltpu.VMEM((B * T, H), jnp.float32)],     # xproj stage
    )

    out_p = pl.pallas_call(
        rnn_fc_kernel,
        out_shape=jax.ShapeDtypeStruct((B, C_pad), jnp.float32),
        grid_spec=grid_spec,
        compiler_params=pltpu.CompilerParams(
            dimension_semantics=("arbitrary",)),
    )(token_ids.astype(jnp.int32), p, w_hh, w_fc, b_fc)

    return out_p[:, :num_classes]


# ---------------------------------------------------------------------------
# Pure-JAX f32 reference (for correctness check)
# ---------------------------------------------------------------------------
def rnn_model_reference(token_ids, params):
    emb = jnp.take(params["embedding"], token_ids, axis=0)       # (B, T, E)
    B = emb.shape[0]
    H = params["w_hh"].shape[0]

    def step(h, x_t):
        h_new = jnp.tanh(x_t @ params["w_ih"] + h @ params["w_hh"]
                         + params["b_ih"] + params["b_hh"])
        return h_new, None

    h0 = jnp.zeros((B, H), jnp.float32)
    h_last, _ = lax.scan(step, h0, jnp.transpose(emb, (1, 0, 2)))
    return h_last @ params["w_fc"] + params["b_fc"]


# ---------------------------------------------------------------------------
# Deterministic parameter construction (synthetic, mirrors __init__ shapes)
# ---------------------------------------------------------------------------
def make_params(key, vocab_size, embed_size, hidden_size, num_classes):
    ks = jax.random.split(key, 7)
    bound = 1.0 / jnp.sqrt(hidden_size)
    return {
        # nn.Embedding(vocab_size, embed_size): N(0, 1)
        "embedding": jax.random.normal(ks[0], (vocab_size, embed_size), jnp.float32),
        # nn.RNN(embed_size, hidden_size): U(-1/sqrt(H), 1/sqrt(H)); stored transposed
        "w_ih": jax.random.uniform(ks[1], (embed_size, hidden_size), jnp.float32, -bound, bound),
        "w_hh": jax.random.uniform(ks[2], (hidden_size, hidden_size), jnp.float32, -bound, bound),
        "b_ih": jax.random.uniform(ks[3], (1, hidden_size), jnp.float32, -bound, bound),
        "b_hh": jax.random.uniform(ks[4], (1, hidden_size), jnp.float32, -bound, bound),
        # nn.Linear(hidden_size, num_classes); stored transposed
        "w_fc": jax.random.uniform(ks[5], (hidden_size, num_classes), jnp.float32, -bound, bound),
        "b_fc": jax.random.uniform(ks[6], (1, num_classes), jnp.float32, -bound, bound),
    }


if __name__ == "__main__":
    # Recreate the module's hyperparameters from the script (no pandas/nltk needed).
    texts = ['I feel great today!', 'I am so sad about the news.',
             'This is frustrating!', "I'm filled with joy.",
             'That was such a disappointment.']
    labels = ['joy', 'sadness', 'anger', 'joy', 'sadness']
    tokens = [t for s in texts for t in s.lower().split()]
    vocab = {w: i + 1 for i, w in enumerate(dict.fromkeys(tokens))}
    vocab_size = len(vocab)                      # 24
    num_classes = len(dict.fromkeys(labels))     # 3
    embed_size = 50
    hidden_size = 128

    batch, seq_len = 2, 8

    key = jax.random.PRNGKey(0)
    pkey, xkey = jax.random.split(key)
    params = make_params(pkey, vocab_size, embed_size, hidden_size, num_classes)
    # NOTE: the original script maps words to ids 1..vocab_size while the
    # embedding table only has rows 0..vocab_size-1 (latent OOB bug there);
    # test ids are drawn in [0, vocab_size) so both implementations stay in range.
    x = jax.random.randint(xkey, (batch, seq_len), 0, vocab_size, dtype=jnp.int32)

    prepared = prepare_params(params)            # one-time prep, not per call
    out = rnn_model_forward(x, prepared, num_classes)
    out = jax.block_until_ready(out)

    ref = rnn_model_reference(x, params)
    assert out.shape == (batch, num_classes)
    # bf16 MXU operands in the recurrence/FC -> relaxed tolerance vs f32 reference.
    assert jnp.allclose(out, ref, atol=5e-2, rtol=5e-2), "mismatch vs reference"

    print("KERNEL_OK")
</pallas_src>

<mosaic_0001>
module attributes {stable_mosaic.version = 11 : i64} {
  func.func @rnn_fc_kernel(%arg0: i32, %arg1: memref<2x8xi32, #tpu.memory_space<smem>>, %arg2: memref<128x128xf32, #tpu.memory_space<vmem>>, %arg3: memref<128x128xbf16, #tpu.memory_space<vmem>>, %arg4: memref<128x128xbf16, #tpu.memory_space<vmem>>, %arg5: memref<1x128xf32, #tpu.memory_space<vmem>>, %arg6: memref<2x128xf32, #tpu.memory_space<vmem>>, %arg7: memref<16x128xf32, #tpu.memory_space<vmem>>) attributes {dimension_semantics = [#tpu.dimension_semantics<arbitrary>], iteration_bounds = array<i64: 1>, scalar_prefetch = 1 : i64, scratch_operands = 1 : i64, tpu.core_type = #tpu.core_type<tc>, window_params = [{pipeline_mode = #tpu.pipeline_mode<synchronous>, transform_indices = @transform_0, window_bounds = array<i64: 128, 128>}, {pipeline_mode = #tpu.pipeline_mode<synchronous>, transform_indices = @transform_1, window_bounds = array<i64: 128, 128>}, {pipeline_mode = #tpu.pipeline_mode<synchronous>, transform_indices = @transform_2, window_bounds = array<i64: 128, 128>}, {pipeline_mode = #tpu.pipeline_mode<synchronous>, transform_indices = @transform_3, window_bounds = array<i64: 1, 128>}, {pipeline_mode = #tpu.pipeline_mode<synchronous>, transform_indices = @transform_4, window_bounds = array<i64: 2, 128>}]} {
    %0 = tpu.iota {dimensions = array<i32: 1>} : vector<1x128xi32>
    %c0 = arith.constant 0 : index
    %c0_0 = arith.constant 0 : index
    %1 = memref.load %arg1[%c0, %c0_0] : memref<2x8xi32, #tpu.memory_space<smem>>
    %2 = vector.broadcast %1 : i32 to vector<1x128xi32>
    %3 = arith.cmpi eq, %0, %2 : vector<1x128xi32>
    %4 = arith.extui %3 : vector<1x128xi1> to vector<1x128xi32>
    %5 = arith.sitofp %4 : vector<1x128xi32> to vector<1x128xf32>
    %c1 = arith.constant 1 : index
    %c0_1 = arith.constant 0 : index
    %6 = memref.load %arg1[%c1, %c0_1] : memref<2x8xi32, #tpu.memory_space<smem>>
    %7 = vector.broadcast %6 : i32 to vector<1x128xi32>
    %8 = arith.cmpi eq, %0, %7 : vector<1x128xi32>
    %9 = arith.extui %8 : vector<1x128xi1> to vector<1x128xi32>
    %10 = arith.sitofp %9 : vector<1x128xi32> to vector<1x128xf32>
    %c0_2 = arith.constant 0 : index
    %c1_3 = arith.constant 1 : index
    %11 = memref.load %arg1[%c0_2, %c1_3] : memref<2x8xi32, #tpu.memory_space<smem>>
    %12 = vector.broadcast %11 : i32 to vector<1x128xi32>
    %13 = arith.cmpi eq, %0, %12 : vector<1x128xi32>
    %14 = arith.extui %13 : vector<1x128xi1> to vector<1x128xi32>
    %15 = arith.sitofp %14 : vector<1x128xi32> to vector<1x128xf32>
    %c1_4 = arith.constant 1 : index
    %c1_5 = arith.constant 1 : index
    %16 = memref.load %arg1[%c1_4, %c1_5] : memref<2x8xi32, #tpu.memory_space<smem>>
    %17 = vector.broadcast %16 : i32 to vector<1x128xi32>
    %18 = arith.cmpi eq, %0, %17 : vector<1x128xi32>
    %19 = arith.extui %18 : vector<1x128xi1> to vector<1x128xi32>
    %20 = arith.sitofp %19 : vector<1x128xi32> to vector<1x128xf32>
    %c0_6 = arith.constant 0 : index
    %c2 = arith.constant 2 : index
    %21 = memref.load %arg1[%c0_6, %c2] : memref<2x8xi32, #tpu.memory_space<smem>>
    %22 = vector.broadcast %21 : i32 to vector<1x128xi32>
    %23 = arith.cmpi eq, %0, %22 : vector<1x128xi32>
    %24 = arith.extui %23 : vector<1x128xi1> to vector<1x128xi32>
    %25 = arith.sitofp %24 : vector<1x128xi32> to vector<1x128xf32>
    %c1_7 = arith.constant 1 : index
    %c2_8 = arith.constant 2 : index
    %26 = memref.load %arg1[%c1_7, %c2_8] : memref<2x8xi32, #tpu.memory_space<smem>>
    %27 = vector.broadcast %26 : i32 to vector<1x128xi32>
    %28 = arith.cmpi eq, %0, %27 : vector<1x128xi32>
    %29 = arith.extui %28 : vector<1x128xi1> to vector<1x128xi32>
    %30 = arith.sitofp %29 : vector<1x128xi32> to vector<1x128xf32>
    %c0_9 = arith.constant 0 : index
    %c3 = arith.constant 3 : index
    %31 = memref.load %arg1[%c0_9, %c3] : memref<2x8xi32, #tpu.memory_space<smem>>
    %32 = vector.broadcast %31 : i32 to vector<1x128xi32>
    %33 = arith.cmpi eq, %0, %32 : vector<1x128xi32>
    %34 = arith.extui %33 : vector<1x128xi1> to vector<1x128xi32>
    %35 = arith.sitofp %34 : vector<1x128xi32> to vector<1x128xf32>
    %c1_10 = arith.constant 1 : index
    %c3_11 = arith.constant 3 : index
    %36 = memref.load %arg1[%c1_10, %c3_11] : memref<2x8xi32, #tpu.memory_space<smem>>
    %37 = vector.broadcast %36 : i32 to vector<1x128xi32>
    %38 = arith.cmpi eq, %0, %37 : vector<1x128xi32>
    %39 = arith.extui %38 : vector<1x128xi1> to vector<1x128xi32>
    %40 = arith.sitofp %39 : vector<1x128xi32> to vector<1x128xf32>
    %c0_12 = arith.constant 0 : index
    %c4 = arith.constant 4 : index
    %41 = memref.load %arg1[%c0_12, %c4] : memref<2x8xi32, #tpu.memory_space<smem>>
    %42 = vector.broadcast %41 : i32 to vector<1x128xi32>
    %43 = arith.cmpi eq, %0, %42 : vector<1x128xi32>
    %44 = arith.extui %43 : vector<1x128xi1> to vector<1x128xi32>
    %45 = arith.sitofp %44 : vector<1x128xi32> to vector<1x128xf32>
    %c1_13 = arith.constant 1 : index
    %c4_14 = arith.constant 4 : index
    %46 = memref.load %arg1[%c1_13, %c4_14] : memref<2x8xi32, #tpu.memory_space<smem>>
    %47 = vector.broadcast %46 : i32 to vector<1x128xi32>
    %48 = arith.cmpi eq, %0, %47 : vector<1x128xi32>
    %49 = arith.extui %48 : vector<1x128xi1> to vector<1x128xi32>
    %50 = arith.sitofp %49 : vector<1x128xi32> to vector<1x128xf32>
    %c0_15 = arith.constant 0 : index
    %c5 = arith.constant 5 : index
    %51 = memref.load %arg1[%c0_15, %c5] : memref<2x8xi32, #tpu.memory_space<smem>>
    %52 = vector.broadcast %51 : i32 to vector<1x128xi32>
    %53 = arith.cmpi eq, %0, %52 : vector<1x128xi32>
    %54 = arith.extui %53 : vector<1x128xi1> to vector<1x128xi32>
    %55 = arith.sitofp %54 : vector<1x128xi32> to vector<1x128xf32>
    %c1_16 = arith.constant 1 : index
    %c5_17 = arith.constant 5 : index
    %56 = memref.load %arg1[%c1_16, %c5_17] : memref<2x8xi32, #tpu.memory_space<smem>>
    %57 = vector.broadcast %56 : i32 to vector<1x128xi32>
    %58 = arith.cmpi eq, %0, %57 : vector<1x128xi32>
    %59 = arith.extui %58 : vector<1x128xi1> to vector<1x128xi32>
    %60 = arith.sitofp %59 : vector<1x128xi32> to vector<1x128xf32>
    %c0_18 = arith.constant 0 : index
    %c6 = arith.constant 6 : index
    %61 = memref.load %arg1[%c0_18, %c6] : memref<2x8xi32, #tpu.memory_space<smem>>
    %62 = vector.broadcast %61 : i32 to vector<1x128xi32>
    %63 = arith.cmpi eq, %0, %62 : vector<1x128xi32>
    %64 = arith.extui %63 : vector<1x128xi1> to vector<1x128xi32>
    %65 = arith.sitofp %64 : vector<1x128xi32> to vector<1x128xf32>
    %c1_19 = arith.constant 1 : index
    %c6_20 = arith.constant 6 : index
    %66 = memref.load %arg1[%c1_19, %c6_20] : memref<2x8xi32, #tpu.memory_space<smem>>
    %67 = vector.broadcast %66 : i32 to vector<1x128xi32>
    %68 = arith.cmpi eq, %0, %67 : vector<1x128xi32>
    %69 = arith.extui %68 : vector<1x128xi1> to vector<1x128xi32>
    %70 = arith.sitofp %69 : vector<1x128xi32> to vector<1x128xf32>
    %c0_21 = arith.constant 0 : index
    %c7 = arith.constant 7 : index
    %71 = memref.load %arg1[%c0_21, %c7] : memref<2x8xi32, #tpu.memory_space<smem>>
    %72 = vector.broadcast %71 : i32 to vector<1x128xi32>
    %73 = arith.cmpi eq, %0, %72 : vector<1x128xi32>
    %74 = arith.extui %73 : vector<1x128xi1> to vector<1x128xi32>
    %75 = arith.sitofp %74 : vector<1x128xi32> to vector<1x128xf32>
    %c1_22 = arith.constant 1 : index
    %c7_23 = arith.constant 7 : index
    %76 = memref.load %arg1[%c1_22, %c7_23] : memref<2x8xi32, #tpu.memory_space<smem>>
    %77 = vector.broadcast %76 : i32 to vector<1x128xi32>
    %78 = arith.cmpi eq, %0, %77 : vector<1x128xi32>
    %79 = arith.extui %78 : vector<1x128xi1> to vector<1x128xi32>
    %80 = arith.sitofp %79 : vector<1x128xi32> to vector<1x128xf32>
    %81 = tpu.concatenate %5, %10, %15, %20, %25, %30, %35, %40, %45, %50, %55, %60, %65, %70, %75, %80 in 0 : vector<1x128xf32>, vector<1x128xf32>, vector<1x128xf32>, vector<1x128xf32>, vector<1x128xf32>, vector<1x128xf32>, vector<1x128xf32>, vector<1x128xf32>, vector<1x128xf32>, vector<1x128xf32>, vector<1x128xf32>, vector<1x128xf32>, vector<1x128xf32>, vector<1x128xf32>, vector<1x128xf32>, vector<1x128xf32> -> vector<16x128xf32>
    %c0_24 = arith.constant 0 : index
    %c0_25 = arith.constant 0 : index
    %82 = vector.load %arg2[%c0_24, %c0_25] : memref<128x128xf32, #tpu.memory_space<vmem>>, vector<128x128xf32>
    %cst = arith.constant dense<0.000000e+00> : vector<16x128xf32>
    %83 = tpu.matmul %81, %82, %cst {dimension_numbers = #tpu.dot_dimension_numbers<[1], [0], [0], [1], [0, 0, 1, 1], [], []>} : vector<16x128xf32>, vector<128x128xf32>, vector<16x128xf32> -> vector<16x128xf32>
    %c0_26 = arith.constant 0 : index
    %c0_27 = arith.constant 0 : index
    %84 = vector.load %arg7[%c0_26, %c0_27] : memref<16x128xf32, #tpu.memory_space<vmem>>, vector<16x128xf32>
    tpu.vector_store %arg7[%c0_26, %c0_27], %83 {strides = array<i32>} : memref<16x128xf32, #tpu.memory_space<vmem>>, vector<16x128xf32>,
    %c0_28 = arith.constant 0 : index
    %c0_29 = arith.constant 0 : index
    %85 = vector.load %arg3[%c0_28, %c0_29] : memref<128x128xbf16, #tpu.memory_space<vmem>>, vector<128x128xbf16>
    %cst_30 = arith.constant 0.000000e+00 : f32
    %86 = vector.broadcast %cst_30 : f32 to vector<2x128xf32>
    %c0_31 = arith.constant 0 : index
    %c0_32 = arith.constant 0 : index
    %87 = vector.load %arg7[%c0_31, %c0_32] : memref<16x128xf32, #tpu.memory_space<vmem>>, vector<2x128xf32>
    %88 = arith.truncf %86 : vector<2x128xf32> to vector<2x128xbf16>
    %cst_33 = arith.constant dense<0.000000e+00> : vector<2x128xf32>
    %89 = tpu.matmul %88, %85, %cst_33 {dimension_numbers = #tpu.dot_dimension_numbers<[1], [0], [0], [1], [0, 0, 1, 1], [], []>} : vector<2x128xbf16>, vector<128x128xbf16>, vector<2x128xf32> -> vector<2x128xf32>
    %90 = arith.addf %87, %89 : vector<2x128xf32>
    %91 = math.tanh %90 : vector<2x128xf32>
    %c2_34 = arith.constant 2 : index
    %c0_35 = arith.constant 0 : index
    %92 = vector.load %arg7[%c2_34, %c0_35] : memref<16x128xf32, #tpu.memory_space<vmem>>, vector<2x128xf32>
    %93 = arith.truncf %91 : vector<2x128xf32> to vector<2x128xbf16>
    %cst_36 = arith.constant dense<0.000000e+00> : vector<2x128xf32>
    %94 = tpu.matmul %93, %85, %cst_36 {dimension_numbers = #tpu.dot_dimension_numbers<[1], [0], [0], [1], [0, 0, 1, 1], [], []>} : vector<2x128xbf16>, vector<128x128xbf16>, vector<2x128xf32> -> vector<2x128xf32>
    %95 = arith.addf %92, %94 : vector<2x128xf32>
    %96 = math.tanh %95 : vector<2x128xf32>
    %c4_37 = arith.constant 4 : index
    %c0_38 = arith.constant 0 : index
    %97 = vector.load %arg7[%c4_37, %c0_38] : memref<16x128xf32, #tpu.memory_space<vmem>>, vector<2x128xf32>
    %98 = arith.truncf %96 : vector<2x128xf32> to vector<2x128xbf16>
    %cst_39 = arith.constant dense<0.000000e+00> : vector<2x128xf32>
    %99 = tpu.matmul %98, %85, %cst_39 {dimension_numbers = #tpu.dot_dimension_numbers<[1], [0], [0], [1], [0, 0, 1, 1], [], []>} : vector<2x128xbf16>, vector<128x128xbf16>, vector<2x128xf32> -> vector<2x128xf32>
    %100 = arith.addf %97, %99 : vector<2x128xf32>
    %101 = math.tanh %100 : vector<2x128xf32>
    %c6_40 = arith.constant 6 : index
    %c0_41 = arith.constant 0 : index
    %102 = vector.load %arg7[%c6_40, %c0_41] : memref<16x128xf32, #tpu.memory_space<vmem>>, vector<2x128xf32>
    %103 = arith.truncf %101 : vector<2x128xf32> to vector<2x128xbf16>
    %cst_42 = arith.constant dense<0.000000e+00> : vector<2x128xf32>
    %104 = tpu.matmul %103, %85, %cst_42 {dimension_numbers = #tpu.dot_dimension_numbers<[1], [0], [0], [1], [0, 0, 1, 1], [], []>} : vector<2x128xbf16>, vector<128x128xbf16>, vector<2x128xf32> -> vector<2x128xf32>
    %105 = arith.addf %102, %104 : vector<2x128xf32>
    %106 = math.tanh %105 : vector<2x128xf32>
    %c8 = arith.constant 8 : index
    %c0_43 = arith.constant 0 : index
    %107 = vector.load %arg7[%c8, %c0_43] : memref<16x128xf32, #tpu.memory_space<vmem>>, vector<2x128xf32>
    %108 = arith.truncf %106 : vector<2x128xf32> to vector<2x128xbf16>
    %cst_44 = arith.constant dense<0.000000e+00> : vector<2x128xf32>
    %109 = tpu.matmul %108, %85, %cst_44 {dimension_numbers = #tpu.dot_dimension_numbers<[1], [0], [0], [1], [0, 0, 1, 1], [], []>} : vector<2x128xbf16>, vector<128x128xbf16>, vector<2x128xf32> -> vector<2x128xf32>
    %110 = arith.addf %107, %109 : vector<2x128xf32>
    %111 = math.tanh %110 : vector<2x128xf32>
    %c10 = arith.constant 10 : index
    %c0_45 = arith.constant 0 : index
    %112 = vector.load %arg7[%c10, %c0_45] : memref<16x128xf32, #tpu.memory_space<vmem>>, vector<2x128xf32>
    %113 = arith.truncf %111 : vector<2x128xf32> to vector<2x128xbf16>
    %cst_46 = arith.constant dense<0.000000e+00> : vector<2x128xf32>
    %114 = tpu.matmul %113, %85, %cst_46 {dimension_numbers = #tpu.dot_dimension_numbers<[1], [0], [0], [1], [0, 0, 1, 1], [], []>} : vector<2x128xbf16>, vector<128x128xbf16>, vector<2x128xf32> -> vector<2x128xf32>
    %115 = arith.addf %112, %114 : vector<2x128xf32>
    %116 = math.tanh %115 : vector<2x128xf32>
    %c12 = arith.constant 12 : index
    %c0_47 = arith.constant 0 : index
    %117 = vector.load %arg7[%c12, %c0_47] : memref<16x128xf32, #tpu.memory_space<vmem>>, vector<2x128xf32>
    %118 = arith.truncf %116 : vector<2x128xf32> to vector<2x128xbf16>
    %cst_48 = arith.constant dense<0.000000e+00> : vector<2x128xf32>
    %119 = tpu.matmul %118, %85, %cst_48 {dimension_numbers = #tpu.dot_dimension_numbers<[1], [0], [0], [1], [0, 0, 1, 1], [], []>} : vector<2x128xbf16>, vector<128x128xbf16>, vector<2x128xf32> -> vector<2x128xf32>
    %120 = arith.addf %117, %119 : vector<2x128xf32>
    %121 = math.tanh %120 : vector<2x128xf32>
    %c14 = arith.constant 14 : index
    %c0_49 = arith.constant 0 : index
    %122 = vector.load %arg7[%c14, %c0_49] : memref<16x128xf32, #tpu.memory_space<vmem>>, vector<2x128xf32>
    %123 = arith.truncf %121 : vector<2x128xf32> to vector<2x128xbf16>
    %cst_50 = arith.constant dense<0.000000e+00> : vector<2x128xf32>
    %124 = tpu.matmul %123, %85, %cst_50 {dimension_numbers = #tpu.dot_dimension_numbers<[1], [0], [0], [1], [0, 0, 1, 1], [], []>} : vector<2x128xbf16>, vector<128x128xbf16>, vector<2x128xf32> -> vector<2x128xf32>
    %125 = arith.addf %122, %124 : vector<2x128xf32>
    %126 = math.tanh %125 : vector<2x128xf32>
    %127 = arith.truncf %126 : vector<2x128xf32> to vector<2x128xbf16>
    %c0_51 = arith.constant 0 : index
    %c0_52 = arith.constant 0 : index
    %128 = vector.load %arg4[%c0_51, %c0_52] : memref<128x128xbf16, #tpu.memory_space<vmem>>, vector<128x128xbf16>
    %cst_53 = arith.constant dense<0.000000e+00> : vector<2x128xf32>
    %129 = tpu.matmul %127, %128, %cst_53 {dimension_numbers = #tpu.dot_dimension_numbers<[1], [0], [0], [1], [0, 0, 1, 1], [], []>} : vector<2x128xbf16>, vector<128x128xbf16>, vector<2x128xf32> -> vector<2x128xf32>
    %c0_54 = arith.constant 0 : index
    %c0_55 = arith.constant 0 : index
    %130 = vector.load %arg5[%c0_54, %c0_55] : memref<1x128xf32, #tpu.memory_space<vmem>>, vector<1x128xf32>
    %131 = vector.broadcast %130 : vector<1x128xf32> to vector<2x128xf32>
    %132 = arith.addf %129, %131 : vector<2x128xf32>
    %c0_56 = arith.constant 0 : index
    %c0_57 = arith.constant 0 : index
    %133 = vector.load %arg6[%c0_56, %c0_57] : memref<2x128xf32, #tpu.memory_space<vmem>>, vector<2x128xf32>
    tpu.vector_store %arg6[%c0_56, %c0_57], %132 {strides = array<i32>} : memref<2x128xf32, #tpu.memory_space<vmem>>, vector<2x128xf32>,
    return
  }
  func.func @transform_0(%arg0: i32, %arg1: memref<2x8xi32, #tpu.memory_space<smem>>) -> (i32, i32) {
    %c0_i32 = arith.constant 0 : i32
    %c0_i32_0 = arith.constant 0 : i32
    %c0_i32_1 = arith.constant 0 : i32
    return %c0_i32, %c0_i32_0 : i32, i32
  }
  func.func @transform_1(%arg0: i32, %arg1: memref<2x8xi32, #tpu.memory_space<smem>>) -> (i32, i32) {
    %c0_i32 = arith.constant 0 : i32
    %c0_i32_0 = arith.constant 0 : i32
    %c0_i32_1 = arith.constant 0 : i32
    return %c0_i32, %c0_i32_0 : i32, i32
  }
  func.func @transform_2(%arg0: i32, %arg1: memref<2x8xi32, #tpu.memory_space<smem>>) -> (i32, i32) {
    %c0_i32 = arith.constant 0 : i32
    %c0_i32_0 = arith.constant 0 : i32
    %c0_i32_1 = arith.constant 0 : i32
    return %c0_i32, %c0_i32_0 : i32, i32
  }
  func.func @transform_3(%arg0: i32, %arg1: memref<2x8xi32, #tpu.memory_space<smem>>) -> (i32, i32) {
    %c0_i32 = arith.constant 0 : i32
    %c0_i32_0 = arith.constant 0 : i32
    %c0_i32_1 = arith.constant 0 : i32
    return %c0_i32, %c0_i32_0 : i32, i32
  }
  func.func @transform_4(%arg0: i32, %arg1: memref<2x8xi32, #tpu.memory_space<smem>>) -> (i32, i32) {
    %c0_i32 = arith.constant 0 : i32
    %c0_i32_0 = arith.constant 0 : i32
    %c0_i32_1 = arith.constant 0 : i32
    return %c0_i32, %c0_i32_0 : i32, i32
  }
}

</mosaic_0001>

<llo_original>
// kernel: tpu_custom_call.1
$region0: #{tpu_custom_call.1}
  #allocation0 [shape = 'u32[]', space=smem, size = 0x4, offset = 0x4, fixed_abs, tag = 'smem constant byte address 0x4 - core index']
  #allocation1 [shape = 'u32[144,128]{1,0:T(1,128)}', space=vmem, size = 0x12000, scoped, tag = 'internal scratch']
  #allocation2 [shape = 'f32[16,128]{1,0:T(8,128)}', space=vmem, size = 0x2000, scoped, tag = 'scratch operand']
  #allocation3 [shape = 's32[1]{0}', space=sflag, size = 0x4, scoped, tag = 'scoped memory for tpu_custom_call.1']
  #allocation4 [shape = 'u8[1024]{0}', space=smem, size = 0x400, scoped, tag = 'prefetched SMEM operand 0']
  %s0 = inlined_call_operand.hbm [shape: s32[2,8], index: 0, kind: input, shape index: {}]
  %s1 = inlined_call_operand.hbm [shape: f32[128,128], index: 1, kind: input, shape index: {}]
  %s2 = inlined_call_operand.hbm [shape: bf16[128,128], index: 2, kind: input, shape index: {}]
  %s3 = inlined_call_operand.hbm [shape: bf16[128,128], index: 3, kind: input, shape index: {}]
  %s4 = inlined_call_operand.vmem [shape: f32[1,128], index: 4, kind: input, shape index: {}]
  %s5 = inlined_call_operand.hbm [shape: f32[2,128], index: 5, kind: output, shape index: {}]
  %s6 = sld [smem:[#allocation0]]
  $region38: #{tpu_custom_call.1} parent=0
    _
  %s8 = ssub.s32 1, %s6
  %s9 = scalar_select 0, %s8, %s6
  %11 = dma.hbm_to_smem %s0, 32, [#allocation4], [#allocation3]
  %12 = dma.done [#allocation3], 32
  %13 = sfence
  $region1: #{tpu_custom_call.1} parent=0
    #allocation5 [shape = 'u8[65536]{0}', space=vmem, size = 0x10000, scoped, tag = 'input window, operand 1, single buffered']
    #allocation6 [shape = 's32[1]{0}', space=sflag, size = 0x4, scoped, tag = 'scoped memory for tpu_custom_call.1']
    #allocation7 [shape = 's32[1]{0}', space=sflag, size = 0x4, scoped, tag = 'scoped memory for tpu_custom_call.1']
    #allocation8 [shape = 'u8[32768]{0}', space=vmem, size = 0x8000, scoped, tag = 'input window, operand 2, single buffered']
    #allocation9 [shape = 's32[1]{0}', space=sflag, size = 0x4, scoped, tag = 'scoped memory for tpu_custom_call.1']
    #allocation10 [shape = 'u8[32768]{0}', space=vmem, size = 0x8000, scoped, tag = 'input window, operand 3, single buffered']
    #allocation11 [shape = 'u8[1024]{0}', space=vmem, size = 0x400, scoped, tag = 'output window, operand 0, single buffered']
    %14 = vsyncpa [#allocation6], 0
    %15 = vsyncpa [#allocation9], 0
    %16 = vsyncpa [#allocation7], 0
    // Predicated region
    $region2: #{tpu_custom_call.1} parent=1 // pred_check
      _
    $region3: #{tpu_custom_call.1} parent=1 // pred_check_branch
      %18 = sbr.rel (0) target = $region5
    $region4: #{tpu_custom_call.1} parent=1 // pred_region
      %s20 = ssub.s32 2048, 2048
      %21 = vsyncadd [#allocation6], %s20
      %s22 = sshll.u32 [#allocation5], 4
      %s23 = int_to_ptr.vmem [resolvable:$true] %s22
      %28 = dma.hbm_to_vmem [thread:$0]  %s1, 2048, %s23, [#allocation6], 128, 128, 8
    $region5: #{tpu_custom_call.1} parent=1 // pred_fallthru
      _
    // Predicated region
    $region6: #{tpu_custom_call.1} parent=1 // pred_check
      _
    $region7: #{tpu_custom_call.1} parent=1 // pred_check_branch
      %30 = sbr.rel (0) target = $region9
    $region8: #{tpu_custom_call.1} parent=1 // pred_region
      %s32 = ssub.s32 1024, 1024
      %33 = vsyncadd [#allocation9], %s32
      %s34 = sshll.u32 [#allocation8], 4
      %s35 = int_to_ptr.vmem [resolvable:$true] %s34
      %40 = dma.hbm_to_vmem [thread:$0]  %s2, 1024, %s35, [#allocation9], 64, 64, 4
    $region9: #{tpu_custom_call.1} parent=1 // pred_fallthru
      _
    // Predicated region
    $region10: #{tpu_custom_call.1} parent=1 // pred_check
      _
    $region11: #{tpu_custom_call.1} parent=1 // pred_check_branch
      %42 = sbr.rel (0) target = $region13
    $region12: #{tpu_custom_call.1} parent=1 // pred_region
      %s44 = ssub.s32 1024, 1024
      %45 = vsyncadd [#allocation9], %s44
      %s46 = sshll.u32 [#allocation10], 4
      %s47 = int_to_ptr.vmem [resolvable:$true] %s46
      %52 = dma.hbm_to_vmem [thread:$0]  %s3, 1024, %s47, [#allocation9], 64, 64, 4
    $region13: #{tpu_custom_call.1} parent=1 // pred_fallthru
      _
    // Predicated region
    $region14: #{tpu_custom_call.1} parent=1 // pred_check
      _
    $region15: #{tpu_custom_call.1} parent=1 // pred_check_branch
      %54 = sbr.rel (0) target = $region17
    $region16: #{tpu_custom_call.1} parent=1 // pred_region
      _
    $region17: #{tpu_custom_call.1} parent=1 // pred_fallthru
      _
    // Predicated region
    $region18: #{tpu_custom_call.1} parent=1 // pred_check
      _
    $region19: #{tpu_custom_call.1} parent=1 // pred_check_branch
      %56 = sbr.rel (0) target = $region21
    $region20: #{tpu_custom_call.1} parent=1 // pred_region
      %57 = dma.done [#allocation6], 2048
    $region21: #{tpu_custom_call.1} parent=1 // pred_fallthru
      _
    // Predicated region
    $region22: #{tpu_custom_call.1} parent=1 // pred_check
      _
    $region23: #{tpu_custom_call.1} parent=1 // pred_check_branch
      %59 = sbr.rel (0) target = $region25
    $region24: #{tpu_custom_call.1} parent=1 // pred_region
      %60 = dma.done [#allocation9], 1024
    $region25: #{tpu_custom_call.1} parent=1 // pred_fallthru
      _
    // Predicated region
    $region26: #{tpu_custom_call.1} parent=1 // pred_check
      _
    $region27: #{tpu_custom_call.1} parent=1 // pred_check_branch
      %62 = sbr.rel (0) target = $region29
    $region28: #{tpu_custom_call.1} parent=1 // pred_region
      %63 = dma.done [#allocation9], 1024
    $region29: #{tpu_custom_call.1} parent=1 // pred_fallthru
      _
    %v65 = vlaneseq
    %v66 = vand.u32 %v65, 127
    %s67 = sld [smem:[#allocation4]]
    %v68 = vstv %s67
    %vm69 = vcmp.eq.s32.totalorder %v66, %v68
    %v70 = vsel %vm69, 1, 0
    %v71 = vcvt.s32.f32 %v70
    %s72 = sld [smem:[#allocation4 + $0x80]]
    %v73 = vstv %s72
    %vm74 = vcmp.eq.s32.totalorder %v66, %v73
    %v75 = vsel %vm74, 1, 0
    %v76 = vcvt.s32.f32 %v75
    %s77 = sld [smem:[#allocation4 + $0x1]]
    %v78 = vstv %s77
    %vm79 = vcmp.eq.s32.totalorder %v66, %v78
    %v80 = vsel %vm79, 1, 0
    %v81 = vcvt.s32.f32 %v80
    %s82 = sld [smem:[#allocation4 + $0x81]]
    %v83 = vstv %s82
    %vm84 = vcmp.eq.s32.totalorder %v66, %v83
    %v85 = vsel %vm84, 1, 0
    %v86 = vcvt.s32.f32 %v85
    %s87 = sld [smem:[#allocation4 + $0x2]]
    %v88 = vstv %s87
    %vm89 = vcmp.eq.s32.totalorder %v66, %v88
    %v90 = vsel %vm89, 1, 0
    %v91 = vcvt.s32.f32 %v90
    %s92 = sld [smem:[#allocation4 + $0x82]]
    %v93 = vstv %s92
    %vm94 = vcmp.eq.s32.totalorder %v66, %v93
    %v95 = vsel %vm94, 1, 0
    %v96 = vcvt.s32.f32 %v95
    %s97 = sld [smem:[#allocation4 + $0x3]]
    %v98 = vstv %s97
    %vm99 = vcmp.eq.s32.totalorder %v66, %v98
    %v100 = vsel %vm99, 1, 0
    %v101 = vcvt.s32.f32 %v100
    %s102 = sld [smem:[#allocation4 + $0x83]]
    %v103 = vstv %s102
    %vm104 = vcmp.eq.s32.totalorder %v66, %v103
    %v105 = vsel %vm104, 1, 0
    %v106 = vcvt.s32.f32 %v105
    %s107 = sld [smem:[#allocation4 + $0x4]]
    %v108 = vstv %s107
    %vm109 = vcmp.eq.s32.totalorder %v66, %v108
    %v110 = vsel %vm109, 1, 0
    %v111 = vcvt.s32.f32 %v110
    %s112 = sld [smem:[#allocation4 + $0x84]]
    %v113 = vstv %s112
    %vm114 = vcmp.eq.s32.totalorder %v66, %v113
    %v115 = vsel %vm114, 1, 0
    %v116 = vcvt.s32.f32 %v115
    %s117 = sld [smem:[#allocation4 + $0x5]]
    %v118 = vstv %s117
    %vm119 = vcmp.eq.s32.totalorder %v66, %v118
    %v120 = vsel %vm119, 1, 0
    %v121 = vcvt.s32.f32 %v120
    %s122 = sld [smem:[#allocation4 + $0x85]]
    %v123 = vstv %s122
    %vm124 = vcmp.eq.s32.totalorder %v66, %v123
    %v125 = vsel %vm124, 1, 0
    %v126 = vcvt.s32.f32 %v125
    %s127 = sld [smem:[#allocation4 + $0x6]]
    %v128 = vstv %s127
    %vm129 = vcmp.eq.s32.totalorder %v66, %v128
    %v130 = vsel %vm129, 1, 0
    %v131 = vcvt.s32.f32 %v130
    %s132 = sld [smem:[#allocation4 + $0x86]]
    %v133 = vstv %s132
    %vm134 = vcmp.eq.s32.totalorder %v66, %v133
    %v135 = vsel %vm134, 1, 0
    %v136 = vcvt.s32.f32 %v135
    %s137 = sld [smem:[#allocation4 + $0x7]]
    %v138 = vstv %s137
    %vm139 = vcmp.eq.s32.totalorder %v66, %v138
    %v140 = vsel %vm139, 1, 0
    %v141 = vcvt.s32.f32 %v140
    %s142 = sld [smem:[#allocation4 + $0x87]]
    %v143 = vstv %s142
    %vm144 = vcmp.eq.s32.totalorder %v66, %v143
    %v145 = vsel %vm144, 1, 0
    %v146 = vcvt.s32.f32 %v145
    %vm147 = vcmask 1040384
    %v148 = vsel %vm147, %v71, %v76
    %vm149 = vcmask 1041408
    %v150 = vsel %vm149, %v148, %v81
    %vm151 = vcmask 1042432
    %v152 = vsel %vm151, %v150, %v86
    %vm153 = vcmask 1043456
    %v154 = vsel %vm153, %v152, %v91
    %vm155 = vcmask 1044480
    %v156 = vsel %vm155, %v154, %v96
    %vm157 = vcmask 1045504
    %v158 = vsel %vm157, %v156, %v101
    %vm159 = vcmask 1046528
    %v160 = vsel %vm159, %v158, %v106
    %v161 = vsel %vm147, %v111, %v116
    %v162 = vsel %vm149, %v161, %v121
    %v163 = vsel %vm151, %v162, %v126
    %v164 = vsel %vm153, %v163, %v131
    %v165 = vsel %vm155, %v164, %v136
    %v166 = vsel %vm157, %v165, %v141
    %v167 = vsel %vm159, %v166, %v146
    %v168 = vld [vmem:[#allocation5] sm:$0xff]
    %v169 = vld [vmem:[#allocation5 + $0x8] sm:$0xff]
    %v170 = vld [vmem:[#allocation5 + $0x10] sm:$0xff]
    %v171 = vld [vmem:[#allocation5 + $0x18] sm:$0xff]
    %v172 = vld [vmem:[#allocation5 + $0x20] sm:$0xff]
    %v173 = vld [vmem:[#allocation5 + $0x28] sm:$0xff]
    %v174 = vld [vmem:[#allocation5 + $0x30] sm:$0xff]
    %v175 = vld [vmem:[#allocation5 + $0x38] sm:$0xff]
    %v176 = vld [vmem:[#allocation5 + $0x40] sm:$0xff]
    %v177 = vld [vmem:[#allocation5 + $0x48] sm:$0xff]
    %v178 = vld [vmem:[#allocation5 + $0x50] sm:$0xff]
    %v179 = vld [vmem:[#allocation5 + $0x58] sm:$0xff]
    %v180 = vld [vmem:[#allocation5 + $0x60] sm:$0xff]
    %v181 = vld [vmem:[#allocation5 + $0x68] sm:$0xff]
    %v182 = vld [vmem:[#allocation5 + $0x70] sm:$0xff]
    %v183 = vld [vmem:[#allocation5 + $0x78] sm:$0xff]
    %184 = vmatprep.subr.mxu0 0.0
    %185 = vmatpush1.msra.mxu0 %v183
    %186 = vmatprep.subr.mxu0 0.0
    %187 = vmatpush1.msra.mxu0 %v182
    %188 = vmatprep.subr.mxu0 0.0
    %189 = vmatpush1.msra.mxu0 %v181
    %190 = vmatprep.subr.mxu0 0.0
    %191 = vmatpush1.msra.mxu0 %v180
    %192 = vmatprep.subr.mxu0 0.0
    %193 = vmatpush1.msra.mxu0 %v179
    %194 = vmatprep.subr.mxu0 0.0
    %195 = vmatpush1.msra.mxu0 %v178
    %196 = vmatprep.subr.mxu0 0.0
    %197 = vmatpush1.msra.mxu0 %v177
    %198 = vmatprep.subr.mxu0 0.0
    %199 = vmatpush1.msra.mxu0 %v176
    %200 = vmatprep.subr.mxu0 0.0
    %201 = vmatpush1.msra.mxu0 %v175
    %202 = vmatprep.subr.mxu0 0.0
    %203 = vmatpush1.msra.mxu0 %v174
    %204 = vmatprep.subr.mxu0 0.0
    %205 = vmatpush1.msra.mxu0 %v173
    %206 = vmatprep.subr.mxu0 0.0
    %207 = vmatpush1.msra.mxu0 %v172
    %208 = vmatprep.subr.mxu0 0.0
    %209 = vmatpush1.msra.mxu0 %v171
    %210 = vmatprep.subr.mxu0 0.0
    %211 = vmatpush1.msra.mxu0 %v170
    %212 = vmatprep.subr.mxu0 0.0
    %213 = vmatpush1.msra.mxu0 %v169
    %214 = vmatprep.subr.mxu0 0.0
    %215 = vmatpush1.msra.mxu0 %v168
    %216 = vmatprep.subr.mxu0 0.0
    %217 = vmatpush2.msra.mxu0 0.0
    %218 = vmatprep.subr.mxu0 0.0
    %219 = vmatpush2.msra.mxu0 0.0
    %220 = vmatprep.subr.mxu0 0.0
    %221 = vmatpush2.msra.mxu0 0.0
    %222 = vmatprep.subr.mxu0 0.0
    %223 = vmatpush2.msra.mxu0 0.0
    %224 = vmatprep.subr.mxu0 0.0
    %225 = vmatpush2.msra.mxu0 0.0
    %226 = vmatprep.subr.mxu0 0.0
    %227 = vmatpush2.msra.mxu0 0.0
    %228 = vmatprep.subr.mxu0 0.0
    %229 = vmatpush2.msra.mxu0 0.0
    %230 = vmatprep.subr.mxu0 0.0
    %231 = vmatpush2.msra.mxu0 0.0
    %232 = vmatprep.subr.mxu0 0.0
    %233 = vmatpush2.msra.mxu0 0.0
    %234 = vmatprep.subr.mxu0 0.0
    %235 = vmatpush2.msra.mxu0 0.0
    %236 = vmatprep.subr.mxu0 0.0
    %237 = vmatpush2.msra.mxu0 0.0
    %238 = vmatprep.subr.mxu0 0.0
    %239 = vmatpush2.msra.mxu0 0.0
    %240 = vmatprep.subr.mxu0 0.0
    %241 = vmatpush2.msra.mxu0 0.0
    %242 = vmatprep.subr.mxu0 0.0
    %243 = vmatpush2.msra.mxu0 0.0
    %244 = vmatprep.subr.mxu0 0.0
    %245 = vmatpush2.msra.mxu0 0.0
    %246 = vmatprep.subr.mxu0 0.0
    %247 = vmatpush2.msra.mxu0 0.0
    %248 = vmatprep.mubr.f32.mxu0 0.0
    %249 = vmatmul.mubr.f32.gmra.mxu0 %v160
    %v250 = vpop.f32.mrf.mxu0
    %v251 = vadd.f32 0.0, %v250
    %v252 = vpop.f32.mrf.mxu0
    %253 = vmatprep.mubr.f32.mxu0 0.0
    %254 = vmatmul.mubr.f32.gmra.mxu0 %v167
    %v255 = vpop.f32.mrf.mxu0
    %v256 = vadd.f32 0.0, %v255
    %v257 = vpop.f32.mrf.mxu0
    %258 = vdwg.mxu0
    %259 = vst [vmem:[#allocation2] sm:$0xff] %v251
    %260 = vst [vmem:[#allocation2 + $0x8] sm:$0xff] %v256
    %v261 = vld [vmem:[#allocation8] sm:$0xf]
    %v262 = vld [vmem:[#allocation8 + $0x4] sm:$0xf]
    %v263 = vld [vmem:[#allocation8 + $0x8] sm:$0xf]
    %v264 = vld [vmem:[#allocation8 + $0xc] sm:$0xf]
    %v265 = vld [vmem:[#allocation8 + $0x10] sm:$0xf]
    %v266 = vld [vmem:[#allocation8 + $0x14] sm:$0xf]
    %v267 = vld [vmem:[#allocation8 + $0x18] sm:$0xf]
    %v268 = vld [vmem:[#allocation8 + $0x1c] sm:$0xf]
    %v269 = vld [vmem:[#allocation8 + $0x20] sm:$0xf]
    %v270 = vld [vmem:[#allocation8 + $0x24] sm:$0xf]
    %v271 = vld [vmem:[#allocation8 + $0x28] sm:$0xf]
    %v272 = vld [vmem:[#allocation8 + $0x2c] sm:$0xf]
    %v273 = vld [vmem:[#allocation8 + $0x30] sm:$0xf]
    %v274 = vld [vmem:[#allocation8 + $0x34] sm:$0xf]
    %v275 = vld [vmem:[#allocation8 + $0x38] sm:$0xf]
    %v276 = vld [vmem:[#allocation8 + $0x3c] sm:$0xf]
    %v277 = vld [vmem:[#allocation2] sm:$0x3]
    %v294 = vunpack.c.l.b16 %v261
    %v295 = vunpack.c.l.b16 %v262
    %v296 = vunpack.c.l.b16 %v263
    %v297 = vunpack.c.l.b16 %v264
    %v298 = vunpack.c.l.b16 %v265
    %v299 = vunpack.c.l.b16 %v266
    %v300 = vunpack.c.l.b16 %v267
    %v301 = vunpack.c.l.b16 %v268
    %v302 = vunpack.c.l.b16 %v269
    %v303 = vunpack.c.l.b16 %v270
    %v304 = vunpack.c.l.b16 %v271
    %v305 = vunpack.c.l.b16 %v272
    %v306 = vunpack.c.l.b16 %v273
    %v307 = vunpack.c.l.b16 %v274
    %v308 = vunpack.c.l.b16 %v275
    %v309 = vunpack.c.l.b16 %v276
    %v310 = vpack.c.b16 %v295, %v294
    %v311 = vpack.c.b16 %v297, %v296
    %v312 = vpack.c.b16 %v299, %v298
    %v313 = vpack.c.b16 %v301, %v300
    %v314 = vpack.c.b16 %v303, %v302
    %v315 = vpack.c.b16 %v305, %v304
    %v316 = vpack.c.b16 %v307, %v306
    %v317 = vpack.c.b16 %v309, %v308
    %326 = vmatprep.subr.bf16.mxu0 0
    %327 = vmatpush1.bf16.msra.mxu0 %v317
    %328 = vmatprep.subr.bf16.mxu0 0
    %329 = vmatpush1.bf16.msra.mxu0 %v316
    %330 = vmatprep.subr.bf16.mxu0 0
    %331 = vmatpush1.bf16.msra.mxu0 %v315
    %332 = vmatprep.subr.bf16.mxu0 0
    %333 = vmatpush1.bf16.msra.mxu0 %v314
    %334 = vmatprep.subr.bf16.mxu0 0
    %335 = vmatpush1.bf16.msra.mxu0 %v313
    %336 = vmatprep.subr.bf16.mxu0 0
    %337 = vmatpush1.bf16.msra.mxu0 %v312
    %338 = vmatprep.subr.bf16.mxu0 0
    %339 = vmatpush1.bf16.msra.mxu0 %v311
    %340 = vmatprep.subr.bf16.mxu0 0
    %341 = vmatpush1.bf16.msra.mxu0 %v310
    %342 = vmatprep.subr.bf16.mxu0 0
    %343 = vmatpush2.bf16.msra.mxu0 0
    %344 = vmatprep.subr.bf16.mxu0 0
    %345 = vmatpush2.bf16.msra.mxu0 0
    %346 = vmatprep.subr.bf16.mxu0 0
    %347 = vmatpush2.bf16.msra.mxu0 0
    %348 = vmatprep.subr.bf16.mxu0 0
    %349 = vmatpush2.bf16.msra.mxu0 0
    %350 = vmatprep.subr.bf16.mxu0 0
    %351 = vmatpush2.bf16.msra.mxu0 0
    %352 = vmatprep.subr.bf16.mxu0 0
    %353 = vmatpush2.bf16.msra.mxu0 0
    %354 = vmatprep.subr.bf16.mxu0 0
    %355 = vmatpush2.bf16.msra.mxu0 0
    %356 = vmatprep.subr.bf16.mxu0 0
    %357 = vmatpush2.bf16.msra.mxu0 0
    %358 = vmatprep.mubr.bf16.mxu0 0
    %359 = vmatmul.mubr.bf16.gmra.mxu0 0
    %v360 = vpop.f32.mrf.mxu0
    %v361 = vadd.f32 0.0, %v360
    %v362 = vpop.f32.mrf.mxu0
    %v363 = vpop.f32.mrf.mxu0
    %v364 = vpop.f32.mrf.mxu0
    %365 = vdwg.mxu0
    %v366 = vadd.f32 %v277, %v361
    %v367 = vtanh.pop %v366
    %v368 = vld [vmem:[#allocation2 + $0x2] sm:$0x3]
    %v369 = vpack.c.bf16 %v367, %v367
    %370 = vmatprep.subr.bf16.mxu0 0
    %371 = vmatpush1.bf16.msra.mxu0 %v317
    %372 = vmatprep.subr.bf16.mxu0 0
    %373 = vmatpush1.bf16.msra.mxu0 %v316
    %374 = vmatprep.subr.bf16.mxu0 0
    %375 = vmatpush1.bf16.msra.mxu0 %v315
    %376 = vmatprep.subr.bf16.mxu0 0
    %377 = vmatpush1.bf16.msra.mxu0 %v314
    %378 = vmatprep.subr.bf16.mxu0 0
    %379 = vmatpush1.bf16.msra.mxu0 %v313
    %380 = vmatprep.subr.bf16.mxu0 0
    %381 = vmatpush1.bf16.msra.mxu0 %v312
    %382 = vmatprep.subr.bf16.mxu0 0
    %383 = vmatpush1.bf16.msra.mxu0 %v311
    %384 = vmatprep.subr.bf16.mxu0 0
    %385 = vmatpush1.bf16.msra.mxu0 %v310
    %386 = vmatprep.subr.bf16.mxu0 0
    %387 = vmatpush2.bf16.msra.mxu0 0
    %388 = vmatprep.subr.bf16.mxu0 0
    %389 = vmatpush2.bf16.msra.mxu0 0
    %390 = vmatprep.subr.bf16.mxu0 0
    %391 = vmatpush2.bf16.msra.mxu0 0
    %392 = vmatprep.subr.bf16.mxu0 0
    %393 = vmatpush2.bf16.msra.mxu0 0
    %394 = vmatprep.subr.bf16.mxu0 0
    %395 = vmatpush2.bf16.msra.mxu0 0
    %396 = vmatprep.subr.bf16.mxu0 0
    %397 = vmatpush2.bf16.msra.mxu0 0
    %398 = vmatprep.subr.bf16.mxu0 0
    %399 = vmatpush2.bf16.msra.mxu0 0
    %400 = vmatprep.subr.bf16.mxu0 0
    %401 = vmatpush2.bf16.msra.mxu0 0
    %402 = vmatprep.mubr.bf16.mxu0 0
    %403 = vmatmul.mubr.bf16.gmra.mxu0 %v369
    %v404 = vpop.f32.mrf.mxu0
    %v405 = vadd.f32 0.0, %v404
    %v406 = vpop.f32.mrf.mxu0
    %v407 = vpop.f32.mrf.mxu0
    %v408 = vpop.f32.mrf.mxu0
    %409 = vdwg.mxu0
    %v410 = vadd.f32 %v368, %v405
    %v411 = vtanh.pop %v410
    %v412 = vld [vmem:[#allocation2 + $0x4] sm:$0x3]
    %v413 = vpack.c.bf16 %v411, %v411
    %414 = vmatprep.subr.bf16.mxu0 0
    %415 = vmatpush1.bf16.msra.mxu0 %v317
    %416 = vmatprep.subr.bf16.mxu0 0
    %417 = vmatpush1.bf16.msra.mxu0 %v316
    %418 = vmatprep.subr.bf16.mxu0 0
    %419 = vmatpush1.bf16.msra.mxu0 %v315
    %420 = vmatprep.subr.bf16.mxu0 0
    %421 = vmatpush1.bf16.msra.mxu0 %v314
    %422 = vmatprep.subr.bf16.mxu0 0
    %423 = vmatpush1.bf16.msra.mxu0 %v313
    %424 = vmatprep.subr.bf16.mxu0 0
    %425 = vmatpush1.bf16.msra.mxu0 %v312
    %426 = vmatprep.subr.bf16.mxu0 0
    %427 = vmatpush1.bf16.msra.mxu0 %v311
    %428 = vmatprep.subr.bf16.mxu0 0
    %429 = vmatpush1.bf16.msra.mxu0 %v310
    %430 = vmatprep.subr.bf16.mxu0 0
    %431 = vmatpush2.bf16.msra.mxu0 0
    %432 = vmatprep.subr.bf16.mxu0 0
    %433 = vmatpush2.bf16.msra.mxu0 0
    %434 = vmatprep.subr.bf16.mxu0 0
    %435 = vmatpush2.bf16.msra.mxu0 0
    %436 = vmatprep.subr.bf16.mxu0 0
    %437 = vmatpush2.bf16.msra.mxu0 0
    %438 = vmatprep.subr.bf16.mxu0 0
    %439 = vmatpush2.bf16.msra.mxu0 0
    %440 = vmatprep.subr.bf16.mxu0 0
    %441 = vmatpush2.bf16.msra.mxu0 0
    %442 = vmatprep.subr.bf16.mxu0 0
    %443 = vmatpush2.bf16.msra.mxu0 0
    %444 = vmatprep.subr.bf16.mxu0 0
    %445 = vmatpush2.bf16.msra.mxu0 0
    %446 = vmatprep.mubr.bf16.mxu0 0
    %447 = vmatmul.mubr.bf16.gmra.mxu0 %v413
    %v448 = vpop.f32.mrf.mxu0
    %v449 = vadd.f32 0.0, %v448
    %v450 = vpop.f32.mrf.mxu0
    %v451 = vpop.f32.mrf.mxu0
    %v452 = vpop.f32.mrf.mxu0
    %453 = vdwg.mxu0
    %v454 = vadd.f32 %v412, %v449
    %v455 = vtanh.pop %v454
    %v456 = vld [vmem:[#allocation2 + $0x6] sm:$0x3]
    %v457 = vpack.c.bf16 %v455, %v455
    %458 = vmatprep.subr.bf16.mxu0 0
    %459 = vmatpush1.bf16.msra.mxu0 %v317
    %460 = vmatprep.subr.bf16.mxu0 0
    %461 = vmatpush1.bf16.msra.mxu0 %v316
    %462 = vmatprep.subr.bf16.mxu0 0
    %463 = vmatpush1.bf16.msra.mxu0 %v315
    %464 = vmatprep.subr.bf16.mxu0 0
    %465 = vmatpush1.bf16.msra.mxu0 %v314
    %466 = vmatprep.subr.bf16.mxu0 0
    %467 = vmatpush1.bf16.msra.mxu0 %v313
    %468 = vmatprep.subr.bf16.mxu0 0
    %469 = vmatpush1.bf16.msra.mxu0 %v312
    %470 = vmatprep.subr.bf16.mxu0 0
    %471 = vmatpush1.bf16.msra.mxu0 %v311
    %472 = vmatprep.subr.bf16.mxu0 0
    %473 = vmatpush1.bf16.msra.mxu0 %v310
    %474 = vmatprep.subr.bf16.mxu0 0
    %475 = vmatpush2.bf16.msra.mxu0 0
    %476 = vmatprep.subr.bf16.mxu0 0
    %477 = vmatpush2.bf16.msra.mxu0 0
    %478 = vmatprep.subr.bf16.mxu0 0
    %479 = vmatpush2.bf16.msra.mxu0 0
    %480 = vmatprep.subr.bf16.mxu0 0
    %481 = vmatpush2.bf16.msra.mxu0 0
    %482 = vmatprep.subr.bf16.mxu0 0
    %483 = vmatpush2.bf16.msra.mxu0 0
    %484 = vmatprep.subr.bf16.mxu0 0
    %485 = vmatpush2.bf16.msra.mxu0 0
    %486 = vmatprep.subr.bf16.mxu0 0
    %487 = vmatpush2.bf16.msra.mxu0 0
    %488 = vmatprep.subr.bf16.mxu0 0
    %489 = vmatpush2.bf16.msra.mxu0 0
    %490 = vmatprep.mubr.bf16.mxu0 0
    %491 = vmatmul.mubr.bf16.gmra.mxu0 %v457
    %v492 = vpop.f32.mrf.mxu0
    %v493 = vadd.f32 0.0, %v492
    %v494 = vpop.f32.mrf.mxu0
    %v495 = vpop.f32.mrf.mxu0
    %v496 = vpop.f32.mrf.mxu0
    %497 = vdwg.mxu0
    %v498 = vadd.f32 %v456, %v493
    %v499 = vtanh.pop %v498
    %v500 = vld [vmem:[#allocation2 + $0x8] sm:$0x3]
    %v501 = vpack.c.bf16 %v499, %v499
    %502 = vmatprep.subr.bf16.mxu0 0
    %503 = vmatpush1.bf16.msra.mxu0 %v317
    %504 = vmatprep.subr.bf16.mxu0 0
    %505 = vmatpush1.bf16.msra.mxu0 %v316
    %506 = vmatprep.subr.bf16.mxu0 0
    %507 = vmatpush1.bf16.msra.mxu0 %v315
    %508 = vmatprep.subr.bf16.mxu0 0
    %509 = vmatpush1.bf16.msra.mxu0 %v314
    %510 = vmatprep.subr.bf16.mxu0 0
    %511 = vmatpush1.bf16.msra.mxu0 %v313
    %512 = vmatprep.subr.bf16.mxu0 0
    %513 = vmatpush1.bf16.msra.mxu0 %v312
    %514 = vmatprep.subr.bf16.mxu0 0
    %515 = vmatpush1.bf16.msra.mxu0 %v311
    %516 = vmatprep.subr.bf16.mxu0 0
    %517 = vmatpush1.bf16.msra.mxu0 %v310
    %518 = vmatprep.subr.bf16.mxu0 0
    %519 = vmatpush2.bf16.msra.mxu0 0
    %520 = vmatprep.subr.bf16.mxu0 0
    %521 = vmatpush2.bf16.msra.mxu0 0
    %522 = vmatprep.subr.bf16.mxu0 0
    %523 = vmatpush2.bf16.msra.mxu0 0
    %524 = vmatprep.subr.bf16.mxu0 0
    %525 = vmatpush2.bf16.msra.mxu0 0
    %526 = vmatprep.subr.bf16.mxu0 0
    %527 = vmatpush2.bf16.msra.mxu0 0
    %528 = vmatprep.subr.bf16.mxu0 0
    %529 = vmatpush2.bf16.msra.mxu0 0
    %530 = vmatprep.subr.bf16.mxu0 0
    %531 = vmatpush2.bf16.msra.mxu0 0
    %532 = vmatprep.subr.bf16.mxu0 0
    %533 = vmatpush2.bf16.msra.mxu0 0
    %534 = vmatprep.mubr.bf16.mxu0 0
    %535 = vmatmul.mubr.bf16.gmra.mxu0 %v501
    %v536 = vpop.f32.mrf.mxu0
    %v537 = vadd.f32 0.0, %v536
    %v538 = vpop.f32.mrf.mxu0
    %v539 = vpop.f32.mrf.mxu0
    %v540 = vpop.f32.mrf.mxu0
    %541 = vdwg.mxu0
    %v542 = vadd.f32 %v500, %v537
    %v543 = vtanh.pop %v542
    %v544 = vld [vmem:[#allocation2 + $0xa] sm:$0x3]
    %v545 = vpack.c.bf16 %v543, %v543
    %546 = vmatprep.subr.bf16.mxu0 0
    %547 = vmatpush1.bf16.msra.mxu0 %v317
    %548 = vmatprep.subr.bf16.mxu0 0
    %549 = vmatpush1.bf16.msra.mxu0 %v316
    %550 = vmatprep.subr.bf16.mxu0 0
    %551 = vmatpush1.bf16.msra.mxu0 %v315
    %552 = vmatprep.subr.bf16.mxu0 0
    %553 = vmatpush1.bf16.msra.mxu0 %v314
    %554 = vmatprep.subr.bf16.mxu0 0
    %555 = vmatpush1.bf16.msra.mxu0 %v313
    %556 = vmatprep.subr.bf16.mxu0 0
    %557 = vmatpush1.bf16.msra.mxu0 %v312
    %558 = vmatprep.subr.bf16.mxu0 0
    %559 = vmatpush1.bf16.msra.mxu0 %v311
    %560 = vmatprep.subr.bf16.mxu0 0
    %561 = vmatpush1.bf16.msra.mxu0 %v310
    %562 = vmatprep.subr.bf16.mxu0 0
    %563 = vmatpush2.bf16.msra.mxu0 0
    %564 = vmatprep.subr.bf16.mxu0 0
    %565 = vmatpush2.bf16.msra.mxu0 0
    %566 = vmatprep.subr.bf16.mxu0 0
    %567 = vmatpush2.bf16.msra.mxu0 0
    %568 = vmatprep.subr.bf16.mxu0 0
    %569 = vmatpush2.bf16.msra.mxu0 0
    %570 = vmatprep.subr.bf16.mxu0 0
    %571 = vmatpush2.bf16.msra.mxu0 0
    %572 = vmatprep.subr.bf16.mxu0 0
    %573 = vmatpush2.bf16.msra.mxu0 0
    %574 = vmatprep.subr.bf16.mxu0 0
    %575 = vmatpush2.bf16.msra.mxu0 0
    %576 = vmatprep.subr.bf16.mxu0 0
    %577 = vmatpush2.bf16.msra.mxu0 0
    %578 = vmatprep.mubr.bf16.mxu0 0
    %579 = vmatmul.mubr.bf16.gmra.mxu0 %v545
    %v580 = vpop.f32.mrf.mxu0
    %v581 = vadd.f32 0.0, %v580
    %v582 = vpop.f32.mrf.mxu0
    %v583 = vpop.f32.mrf.mxu0
    %v584 = vpop.f32.mrf.mxu0
    %585 = vdwg.mxu0
    %v586 = vadd.f32 %v544, %v581
    %v587 = vtanh.pop %v586
    %v588 = vld [vmem:[#allocation2 + $0xc] sm:$0x3]
    %v589 = vpack.c.bf16 %v587, %v587
    %590 = vmatprep.subr.bf16.mxu0 0
    %591 = vmatpush1.bf16.msra.mxu0 %v317
    %592 = vmatprep.subr.bf16.mxu0 0
    %593 = vmatpush1.bf16.msra.mxu0 %v316
    %594 = vmatprep.subr.bf16.mxu0 0
    %595 = vmatpush1.bf16.msra.mxu0 %v315
    %596 = vmatprep.subr.bf16.mxu0 0
    %597 = vmatpush1.bf16.msra.mxu0 %v314
    %598 = vmatprep.subr.bf16.mxu0 0
    %599 = vmatpush1.bf16.msra.mxu0 %v313
    %600 = vmatprep.subr.bf16.mxu0 0
    %601 = vmatpush1.bf16.msra.mxu0 %v312
    %602 = vmatprep.subr.bf16.mxu0 0
    %603 = vmatpush1.bf16.msra.mxu0 %v311
    %604 = vmatprep.subr.bf16.mxu0 0
    %605 = vmatpush1.bf16.msra.mxu0 %v310
    %606 = vmatprep.subr.bf16.mxu0 0
    %607 = vmatpush2.bf16.msra.mxu0 0
    %608 = vmatprep.subr.bf16.mxu0 0
    %609 = vmatpush2.bf16.msra.mxu0 0
    %610 = vmatprep.subr.bf16.mxu0 0
    %611 = vmatpush2.bf16.msra.mxu0 0
    %612 = vmatprep.subr.bf16.mxu0 0
    %613 = vmatpush2.bf16.msra.mxu0 0
    %614 = vmatprep.subr.bf16.mxu0 0
    %615 = vmatpush2.bf16.msra.mxu0 0
    %616 = vmatprep.subr.bf16.mxu0 0
    %617 = vmatpush2.bf16.msra.mxu0 0
    %618 = vmatprep.subr.bf16.mxu0 0
    %619 = vmatpush2.bf16.msra.mxu0 0
    %620 = vmatprep.subr.bf16.mxu0 0
    %621 = vmatpush2.bf16.msra.mxu0 0
    %622 = vmatprep.mubr.bf16.mxu0 0
    %623 = vmatmul.mubr.bf16.gmra.mxu0 %v589
    %v624 = vpop.f32.mrf.mxu0
    %v625 = vadd.f32 0.0, %v624
    %v626 = vpop.f32.mrf.mxu0
    %v627 = vpop.f32.mrf.mxu0
    %v628 = vpop.f32.mrf.mxu0
    %629 = vdwg.mxu0
    %v630 = vadd.f32 %v588, %v625
    %v631 = vtanh.pop %v630
    %v632 = vld [vmem:[#allocation2 + $0xe] sm:$0x3]
    %v633 = vpack.c.bf16 %v631, %v631
    %634 = vmatprep.subr.bf16.mxu0 0
    %635 = vmatpush1.bf16.msra.mxu0 %v317
    %636 = vmatprep.subr.bf16.mxu0 0
    %637 = vmatpush1.bf16.msra.mxu0 %v316
    %638 = vmatprep.subr.bf16.mxu0 0
    %639 = vmatpush1.bf16.msra.mxu0 %v315
    %640 = vmatprep.subr.bf16.mxu0 0
    %641 = vmatpush1.bf16.msra.mxu0 %v314
    %642 = vmatprep.subr.bf16.mxu0 0
    %643 = vmatpush1.bf16.msra.mxu0 %v313
    %644 = vmatprep.subr.bf16.mxu0 0
    %645 = vmatpush1.bf16.msra.mxu0 %v312
    %646 = vmatprep.subr.bf16.mxu0 0
    %647 = vmatpush1.bf16.msra.mxu0 %v311
    %648 = vmatprep.subr.bf16.mxu0 0
    %649 = vmatpush1.bf16.msra.mxu0 %v310
    %650 = vmatprep.subr.bf16.mxu0 0
    %651 = vmatpush2.bf16.msra.mxu0 0
    %652 = vmatprep.subr.bf16.mxu0 0
    %653 = vmatpush2.bf16.msra.mxu0 0
    %654 = vmatprep.subr.bf16.mxu0 0
    %655 = vmatpush2.bf16.msra.mxu0 0
    %656 = vmatprep.subr.bf16.mxu0 0
    %657 = vmatpush2.bf16.msra.mxu0 0
    %658 = vmatprep.subr.bf16.mxu0 0
    %659 = vmatpush2.bf16.msra.mxu0 0
    %660 = vmatprep.subr.bf16.mxu0 0
    %661 = vmatpush2.bf16.msra.mxu0 0
    %662 = vmatprep.subr.bf16.mxu0 0
    %663 = vmatpush2.bf16.msra.mxu0 0
    %664 = vmatprep.subr.bf16.mxu0 0
    %665 = vmatpush2.bf16.msra.mxu0 0
    %666 = vmatprep.mubr.bf16.mxu0 0
    %667 = vmatmul.mubr.bf16.gmra.mxu0 %v633
    %v668 = vpop.f32.mrf.mxu0
    %v669 = vadd.f32 0.0, %v668
    %v670 = vpop.f32.mrf.mxu0
    %v671 = vpop.f32.mrf.mxu0
    %v672 = vpop.f32.mrf.mxu0
    %673 = vdwg.mxu0
    %v674 = vadd.f32 %v632, %v669
    %v675 = vtanh.pop %v674
    %v676 = vpack.c.bf16 %v675, %v675
    %v677 = vld [vmem:[#allocation10] sm:$0xf]
    %v678 = vld [vmem:[#allocation10 + $0x4] sm:$0xf]
    %v679 = vld [vmem:[#allocation10 + $0x8] sm:$0xf]
    %v680 = vld [vmem:[#allocation10 + $0xc] sm:$0xf]
    %v681 = vld [vmem:[#allocation10 + $0x10] sm:$0xf]
    %v682 = vld [vmem:[#allocation10 + $0x14] sm:$0xf]
    %v683 = vld [vmem:[#allocation10 + $0x18] sm:$0xf]
    %v684 = vld [vmem:[#allocation10 + $0x1c] sm:$0xf]
    %v685 = vld [vmem:[#allocation10 + $0x20] sm:$0xf]
    %v686 = vld [vmem:[#allocation10 + $0x24] sm:$0xf]
    %v687 = vld [vmem:[#allocation10 + $0x28] sm:$0xf]
    %v688 = vld [vmem:[#allocation10 + $0x2c] sm:$0xf]
    %v689 = vld [vmem:[#allocation10 + $0x30] sm:$0xf]
    %v690 = vld [vmem:[#allocation10 + $0x34] sm:$0xf]
    %v691 = vld [vmem:[#allocation10 + $0x38] sm:$0xf]
    %v692 = vld [vmem:[#allocation10 + $0x3c] sm:$0xf]
    %v693 = vld [vmem:[%s4] sm:$0x1]
    %v695 = vlaneseq
    %v696 = vshrl.u32 %v695, 7
    %v697 = vsub.s32 0, %v696
    %v698 = vrot.slane %v693, %v697
    %v716 = vunpack.c.l.b16 %v677
    %v717 = vunpack.c.l.b16 %v678
    %v718 = vunpack.c.l.b16 %v679
    %v719 = vunpack.c.l.b16 %v680
    %v720 = vunpack.c.l.b16 %v681
    %v721 = vunpack.c.l.b16 %v682
    %v722 = vunpack.c.l.b16 %v683
    %v723 = vunpack.c.l.b16 %v684
    %v724 = vunpack.c.l.b16 %v685
    %v725 = vunpack.c.l.b16 %v686
    %v726 = vunpack.c.l.b16 %v687
    %v727 = vunpack.c.l.b16 %v688
    %v728 = vunpack.c.l.b16 %v689
    %v729 = vunpack.c.l.b16 %v690
    %v730 = vunpack.c.l.b16 %v691
    %v731 = vunpack.c.l.b16 %v692
    %v732 = vpack.c.b16 %v717, %v716
    %v733 = vpack.c.b16 %v719, %v718
    %v734 = vpack.c.b16 %v721, %v720
    %v735 = vpack.c.b16 %v723, %v722
    %v736 = vpack.c.b16 %v725, %v724
    %v737 = vpack.c.b16 %v727, %v726
    %v738 = vpack.c.b16 %v729, %v728
    %v739 = vpack.c.b16 %v731, %v730
    %748 = vmatprep.subr.bf16.mxu0 0
    %749 = vmatpush1.bf16.msra.mxu0 %v739
    %750 = vmatprep.subr.bf16.mxu0 0
    %751 = vmatpush1.bf16.msra.mxu0 %v738
    %752 = vmatprep.subr.bf16.mxu0 0
    %753 = vmatpush1.bf16.msra.mxu0 %v737
    %754 = vmatprep.subr.bf16.mxu0 0
    %755 = vmatpush1.bf16.msra.mxu0 %v736
    %756 = vmatprep.subr.bf16.mxu0 0
    %757 = vmatpush1.bf16.msra.mxu0 %v735
    %758 = vmatprep.subr.bf16.mxu0 0
    %759 = vmatpush1.bf16.msra.mxu0 %v734
    %760 = vmatprep.subr.bf16.mxu0 0
    %761 = vmatpush1.bf16.msra.mxu0 %v733
    %762 = vmatprep.subr.bf16.mxu0 0
    %763 = vmatpush1.bf16.msra.mxu0 %v732
    %764 = vmatprep.subr.bf16.mxu0 0
    %765 = vmatpush2.bf16.msra.mxu0 0
    %766 = vmatprep.subr.bf16.mxu0 0
    %767 = vmatpush2.bf16.msra.mxu0 0
    %768 = vmatprep.subr.bf16.mxu0 0
    %769 = vmatpush2.bf16.msra.mxu0 0
    %770 = vmatprep.subr.bf16.mxu0 0
    %771 = vmatpush2.bf16.msra.mxu0 0
    %772 = vmatprep.subr.bf16.mxu0 0
    %773 = vmatpush2.bf16.msra.mxu0 0
    %774 = vmatprep.subr.bf16.mxu0 0
    %775 = vmatpush2.bf16.msra.mxu0 0
    %776 = vmatprep.subr.bf16.mxu0 0
    %777 = vmatpush2.bf16.msra.mxu0 0
    %778 = vmatprep.subr.bf16.mxu0 0
    %779 = vmatpush2.bf16.msra.mxu0 0
    %780 = vmatprep.mubr.bf16.mxu0 0
    %781 = vmatmul.mubr.bf16.gmra.mxu0 %v676
    %v782 = vpop.f32.mrf.mxu0
    %v783 = vadd.f32 %v698, %v782
    %v784 = vpop.f32.mrf.mxu0
    %v785 = vpop.f32.mrf.mxu0
    %v786 = vpop.f32.mrf.mxu0
    %787 = vdwg.mxu0
    %788 = vst [vmem:[#allocation11] sm:$0x3] %v783
    // Predicated region
    $region30: #{tpu_custom_call.1} parent=1 // pred_check
      _
    $region31: #{tpu_custom_call.1} parent=1 // pred_check_branch
      %790 = sbr.rel (0) target = $region33
    $region32: #{tpu_custom_call.1} parent=1 // pred_region
      %s792 = ssub.s32 32, 32
      %793 = vsyncadd [#allocation7], %s792
      %s795 = sshll.u32 [#allocation11], 4
      %s796 = int_to_ptr.vmem [resolvable:$true] %s795
      %798 = dma.vmem_to_hbm [thread:$0]  %s796, 32, %s5, [#allocation7]
    $region33: #{tpu_custom_call.1} parent=1 // pred_fallthru
      _
    // Predicated region
    $region34: #{tpu_custom_call.1} parent=1 // pred_check
      _
    $region35: #{tpu_custom_call.1} parent=1 // pred_check_branch
      %800 = sbr.rel (0) target = $region37
    $region36: #{tpu_custom_call.1} parent=1 // pred_region
      %801 = dma.done [#allocation7], 32
    $region37: #{tpu_custom_call.1} parent=1 // pred_fallthru
      _
    %802 = vsyncpa [#allocation6], 1
    %803 = vsyncpa [#allocation9], 1
    %804 = vsyncpa [#allocation7], 1

</llo_original>
